<compile_context>
chip_gen: v6e
topology: v6e:2x2x1
jax: 0.10.0
libtpu: 0.0.40
codegen_flags: <defaults>
</compile_context>

<pallas_src>
import functools

import jax
import jax.numpy as jnp
from jax import lax
from jax.experimental import pallas as pl
from jax.experimental.pallas import tpu as pltpu

# Finite "-inf" pad value: exp(_NEG - anything_reasonable) underflows to exactly 0 in
# f32, so padded states / padded batch rows contribute nothing and never produce NaNs.
_NEG = -1e30


def _round_up(x, m):
    return ((x + m - 1) // m) * m


# ----------------------------------------------------------------------------
# Kernel 1: T^T = softmax(U, dim=0)^T, computed once per call.
# Input is U^T (padded), so the column-softmax of U becomes an independent
# lane-axis softmax per row, and the output is already (K, N) contraction-major.
# ----------------------------------------------------------------------------
def _softmax_rows_kernel(ut_ref, tt_ref):
    u = ut_ref[...]                                      # (TR, Np)
    m = jnp.max(u, axis=-1, keepdims=True)               # (TR, 1)
    e = jnp.exp(u - m)                                   # (TR, Np)
    tt_ref[...] = e / jnp.sum(e, axis=-1, keepdims=True)


def _compute_transition_t(u_t_padded):
    """(Np, Np) T^T, where T = softmax(U, dim=0).  u_t_padded is padded U^T."""
    Np = u_t_padded.shape[0]
    TR = Np if Np <= 1024 else 128                       # rows are independent
    return pl.pallas_call(
        _softmax_rows_kernel,
        out_shape=jax.ShapeDtypeStruct((Np, Np), jnp.float32),
        grid_spec=pltpu.PrefetchScalarGridSpec(
            num_scalar_prefetch=0,
            grid=(Np // TR,),
            in_specs=[pl.BlockSpec((TR, Np), lambda r: (0, 0) if TR == Np else (r, 0))],
            out_specs=pl.BlockSpec((TR, Np), lambda r: (0, 0) if TR == Np else (r, 0)),
        ),
        compiler_params=pltpu.CompilerParams(
            dimension_semantics=("parallel",)),
    )(u_t_padded)


# ----------------------------------------------------------------------------
# Kernel 2: single-step forward (matches the PyTorch module forward exactly).
# ----------------------------------------------------------------------------
def _transition_matmul_kernel(tt_ref, la_ref, out_ref):
    # tt_ref:  (Np, Np)  T^T (contraction-major), precomputed once
    # la_ref:  (TB, Np)  log_alpha batch tile
    la = la_ref[...]
    c = jnp.max(la, axis=-1, keepdims=True)              # (TB, 1)
    p = jnp.exp(la - c)                                   # (TB, Np)
    # out[b, i] = c[b] + log( sum_k p[b, k] * T^T[k, i] )  -> canonical MXU matmul
    s = jnp.dot(p, tt_ref[...], preferred_element_type=jnp.float32)
    out_ref[...] = c + jnp.log(s)


def _pad_inputs(unnormalized_transition_matrix, log_alpha, Np, Bp):
    B, N = log_alpha.shape
    u_t = jnp.transpose(unnormalized_transition_matrix.astype(jnp.float32))
    if Np != N:
        u_t = jnp.pad(u_t, ((0, Np - N), (0, Np - N)), constant_values=_NEG)
    la = log_alpha.astype(jnp.float32)
    if (Bp != B) or (Np != N):
        la = jnp.pad(la, ((0, Bp - B), (0, Np - N)), constant_values=_NEG)
    return u_t, la


@functools.partial(jax.jit, static_argnames=("block_b",))
def transition_model_forward(unnormalized_transition_matrix, log_alpha, *, block_b=512):
    """unnormalized_transition_matrix: (N, N) f32; log_alpha: (B, N) f32 -> (B, N) f32."""
    B, N = log_alpha.shape
    assert unnormalized_transition_matrix.shape == (N, N)

    Np = _round_up(N, 128)                       # lane-dense state dim
    TB = min(_round_up(B, 8), block_b)           # sublane-dense batch tile
    Bp = _round_up(B, TB)

    u_t, la = _pad_inputs(unnormalized_transition_matrix, log_alpha, Np, Bp)
    tt = _compute_transition_t(u_t)              # softmax(U) computed exactly once

    out_p = pl.pallas_call(
        _transition_matmul_kernel,
        out_shape=jax.ShapeDtypeStruct((Bp, Np), jnp.float32),
        grid_spec=pltpu.PrefetchScalarGridSpec(
            num_scalar_prefetch=0,
            grid=(Bp // TB,),
            in_specs=[
                pl.BlockSpec((Np, Np), lambda b: (0, 0)),   # constant block: one DMA
                pl.BlockSpec((TB, Np), lambda b: (b, 0)),   # batch tile
            ],
            out_specs=pl.BlockSpec((TB, Np), lambda b: (b, 0)),
        ),
        compiler_params=pltpu.CompilerParams(
            dimension_semantics=("parallel",)),             # megacore-shardable on v7x
    )(tt, la)

    if (Bp != B) or (Np != N):
        out_p = out_p[:B, :N]                    # slice only when we actually padded
    return out_p


# ----------------------------------------------------------------------------
# Fused time-loop variant: applies the transition model `num_steps` times in one
# pallas_call.  grid = (batch_tiles, num_steps): batch outermost ("parallel",
# megacore-shardable), time innermost ("arbitrary", sequential recurrence).
# log_alpha stays resident in a (TB, Np) VMEM scratch across the time loop; with
# return_all_steps=False only the final alpha is written back to HBM.
# ----------------------------------------------------------------------------
def _fused_transition_kernel(tt_ref, la0_ref, out_ref, alpha_scr, *, all_steps):
    t = pl.program_id(1)

    @pl.when(t == 0)                             # fires at the start of every batch tile
    def _():
        alpha_scr[...] = la0_ref[...]

    la = alpha_scr[...]                                   # (TB, Np)
    c = jnp.max(la, axis=-1, keepdims=True)               # (TB, 1)
    p = jnp.exp(la - c)                                    # (TB, Np)
    s = jnp.dot(p, tt_ref[...], preferred_element_type=jnp.float32)
    new_alpha = c + jnp.log(s)
    alpha_scr[...] = new_alpha
    if all_steps:
        out_ref[0] = new_alpha                   # lane-dense (1, TB, Np) slab per step
    else:
        out_ref[...] = new_alpha                 # resident block; HBM writeback only
                                                 # when the batch tile changes


@functools.partial(jax.jit, static_argnames=("num_steps", "return_all_steps", "block_b"))
def transition_model_forward_steps(unnormalized_transition_matrix, log_alpha, *,
                                   num_steps, return_all_steps=True, block_b=512):
    """Applies the module `num_steps` times.

    return_all_steps=True  -> (num_steps, B, N), step s == module applied s+1 times.
    return_all_steps=False -> (B, N), only the final alpha (no per-step HBM traffic).
    """
    B, N = log_alpha.shape
    assert unnormalized_transition_matrix.shape == (N, N)
    assert num_steps >= 1

    Np = _round_up(N, 128)
    TB = min(_round_up(B, 8), block_b)
    Bp = _round_up(B, TB)

    u_t, la = _pad_inputs(unnormalized_transition_matrix, log_alpha, Np, Bp)
    tt = _compute_transition_t(u_t)

    if return_all_steps:
        out_shape = jax.ShapeDtypeStruct((num_steps, Bp, Np), jnp.float32)
        out_spec = pl.BlockSpec((1, TB, Np), lambda b, t: (t, b, 0))
    else:
        out_shape = jax.ShapeDtypeStruct((Bp, Np), jnp.float32)
        out_spec = pl.BlockSpec((TB, Np), lambda b, t: (b, 0))

    out_p = pl.pallas_call(
        functools.partial(_fused_transition_kernel, all_steps=return_all_steps),
        out_shape=out_shape,
        grid_spec=pltpu.PrefetchScalarGridSpec(
            num_scalar_prefetch=0,
            grid=(Bp // TB, num_steps),
            in_specs=[
                pl.BlockSpec((Np, Np), lambda b, t: (0, 0)),  # constant: single DMA
                pl.BlockSpec((TB, Np), lambda b, t: (b, 0)),  # initial log_alpha tile
            ],
            out_specs=out_spec,
            scratch_shapes=[
                pltpu.VMEM((TB, Np), jnp.float32),            # running log_alpha
            ],
        ),
        compiler_params=pltpu.CompilerParams(
            dimension_semantics=("parallel", "arbitrary")),
    )(tt, la)

    if return_all_steps:
        if (Bp != B) or (Np != N):
            out_p = out_p[:, :B, :N]
    else:
        if (Bp != B) or (Np != N):
            out_p = out_p[:B, :N]
    return out_p


# ----------------------------------------------------------------------------
# Pure-JAX reference reproducing the PyTorch module exactly.
# ----------------------------------------------------------------------------
def _reference_forward(u, log_alpha):
    log_t = jax.nn.log_softmax(u, axis=0)                        # dim=0 softmax
    elem = log_t[None, :, :] + log_alpha[:, None, :]             # (B, N, N)
    return jax.scipy.special.logsumexp(elem, axis=-1)            # (B, N)


if __name__ == "__main__":
    key = jax.random.PRNGKey(0)
    k_u, k_a = jax.random.split(key)

    N = 16   # number of HMM states
    B = 4    # batch size

    # Deterministic "parameter" init (stand-in for torch.randn(N, N)).
    unnormalized_transition_matrix = jax.random.normal(k_u, (N, N), dtype=jnp.float32)
    log_alpha = jax.random.normal(k_a, (B, N), dtype=jnp.float32)

    # --- single-step forward (the module's forward) ---
    out = jax.block_until_ready(
        transition_model_forward(unnormalized_transition_matrix, log_alpha))
    ref = _reference_forward(unnormalized_transition_matrix, log_alpha)
    assert out.shape == (B, N)
    assert jnp.allclose(out, ref, atol=1e-5, rtol=1e-5), "single-step mismatch vs reference"

    # --- aligned shapes exercise the zero-copy (no pad / no slice) path ---
    B2, N2 = 8, 128
    u2 = jax.random.normal(jax.random.PRNGKey(1), (N2, N2), dtype=jnp.float32)
    la2 = jax.random.normal(jax.random.PRNGKey(2), (B2, N2), dtype=jnp.float32)
    out2 = jax.block_until_ready(transition_model_forward(u2, la2))
    assert jnp.allclose(out2, _reference_forward(u2, la2), atol=1e-5, rtol=1e-5), \
        "aligned-shape mismatch vs reference"

    # --- fused multi-step variant (time loop kept inside one kernel) ---
    T_steps = 8
    outs = jax.block_until_ready(
        transition_model_forward_steps(unnormalized_transition_matrix, log_alpha,
                                       num_steps=T_steps))
    assert outs.shape == (T_steps, B, N)
    ref_alpha = log_alpha
    for s in range(T_steps):
        ref_alpha = _reference_forward(unnormalized_transition_matrix, ref_alpha)
        assert jnp.allclose(outs[s], ref_alpha, atol=1e-4, rtol=1e-4), \
            f"fused step {s} mismatch vs reference"

    # --- final-alpha-only variant (skips per-step HBM writeback) ---
    final = jax.block_until_ready(
        transition_model_forward_steps(unnormalized_transition_matrix, log_alpha,
                                       num_steps=T_steps, return_all_steps=False))
    assert final.shape == (B, N)
    assert jnp.allclose(final, outs[-1], atol=1e-5, rtol=1e-5), \
        "final-only fused output mismatch"

    print("KERNEL_OK")
</pallas_src>

<mosaic_0001>
module attributes {stable_mosaic.version = 11 : i64} {
  func.func @_softmax_rows_kernel(%arg0: i32, %arg1: memref<128x128xf32, #tpu.memory_space<vmem>>, %arg2: memref<128x128xf32, #tpu.memory_space<vmem>>) attributes {dimension_semantics = [#tpu.dimension_semantics<parallel>], iteration_bounds = array<i64: 1>, scalar_prefetch = 0 : i64, scratch_operands = 0 : i64, tpu.core_type = #tpu.core_type<tc>, window_params = [{pipeline_mode = #tpu.pipeline_mode<synchronous>, transform_indices = @transform_0, window_bounds = array<i64: 128, 128>}, {pipeline_mode = #tpu.pipeline_mode<synchronous>, transform_indices = @transform_1, window_bounds = array<i64: 128, 128>}]} {
    %c0 = arith.constant 0 : index
    %c0_0 = arith.constant 0 : index
    %0 = vector.load %arg1[%c0, %c0_0] : memref<128x128xf32, #tpu.memory_space<vmem>>, vector<128x128xf32>
    %cst = arith.constant dense<0xFF800000> : vector<128xf32>
    %1 = vector.multi_reduction <maximumf>, %0, %cst [1] : vector<128x128xf32> to vector<128xf32>
    %2 = vector.shape_cast %1 : vector<128xf32> to vector<128x1xf32>
    %3 = vector.broadcast %2 : vector<128x1xf32> to vector<128x128xf32>
    %4 = arith.subf %0, %3 : vector<128x128xf32>
    %5 = math.exp %4 : vector<128x128xf32>
    %cst_1 = arith.constant dense<0.000000e+00> : vector<128xf32>
    %6 = vector.multi_reduction <add>, %5, %cst_1 [1] : vector<128x128xf32> to vector<128xf32>
    %7 = vector.shape_cast %6 : vector<128xf32> to vector<128x1xf32>
    %8 = vector.broadcast %7 : vector<128x1xf32> to vector<128x128xf32>
    %9 = arith.divf %5, %8 : vector<128x128xf32>
    %c0_2 = arith.constant 0 : index
    %c0_3 = arith.constant 0 : index
    %10 = vector.load %arg2[%c0_2, %c0_3] : memref<128x128xf32, #tpu.memory_space<vmem>>, vector<128x128xf32>
    tpu.vector_store %arg2[%c0_2, %c0_3], %9 {strides = array<i32>} : memref<128x128xf32, #tpu.memory_space<vmem>>, vector<128x128xf32>,
    return
  }
  func.func @transform_0(%arg0: i32) -> (i32, i32) {
    %c0_i32 = arith.constant 0 : i32
    %c0_i32_0 = arith.constant 0 : i32
    %c0_i32_1 = arith.constant 0 : i32
    return %c0_i32, %c0_i32_0 : i32, i32
  }
  func.func @transform_1(%arg0: i32) -> (i32, i32) {
    %c0_i32 = arith.constant 0 : i32
    %c0_i32_0 = arith.constant 0 : i32
    %c0_i32_1 = arith.constant 0 : i32
    return %c0_i32, %c0_i32_0 : i32, i32
  }
}

module attributes {stable_mosaic.version = 11 : i64} {
  func.func @_transition_matmul_kernel(%arg0: i32, %arg1: memref<128x128xf32, #tpu.memory_space<vmem>>, %arg2: memref<8x128xf32, #tpu.memory_space<vmem>>, %arg3: memref<8x128xf32, #tpu.memory_space<vmem>>) attributes {dimension_semantics = [#tpu.dimension_semantics<parallel>], iteration_bounds = array<i64: 1>, scalar_prefetch = 0 : i64, scratch_operands = 0 : i64, tpu.core_type = #tpu.core_type<tc>, window_params = [{pipeline_mode = #tpu.pipeline_mode<synchronous>, transform_indices = @transform_0, window_bounds = array<i64: 128, 128>}, {transform_indices = @transform_1, window_bounds = array<i64: 8, 128>}, {transform_indices = @transform_2, window_bounds = array<i64: 8, 128>}]} {
    %c0 = arith.constant 0 : index
    %c0_0 = arith.constant 0 : index
    %0 = vector.load %arg2[%c0, %c0_0] : memref<8x128xf32, #tpu.memory_space<vmem>>, vector<8x128xf32>
    %cst = arith.constant dense<0xFF800000> : vector<8xf32>
    %1 = vector.multi_reduction <maximumf>, %0, %cst [1] : vector<8x128xf32> to vector<8xf32>
    %2 = vector.shape_cast %1 : vector<8xf32> to vector<8x1xf32>
    %3 = vector.broadcast %2 : vector<8x1xf32> to vector<8x128xf32>
    %4 = arith.subf %0, %3 : vector<8x128xf32>
    %5 = math.exp %4 : vector<8x128xf32>
    %c0_1 = arith.constant 0 : index
    %c0_2 = arith.constant 0 : index
    %6 = vector.load %arg1[%c0_1, %c0_2] : memref<128x128xf32, #tpu.memory_space<vmem>>, vector<128x128xf32>
    %cst_3 = arith.constant dense<0.000000e+00> : vector<8x128xf32>
    %7 = tpu.matmul %5, %6, %cst_3 {dimension_numbers = #tpu.dot_dimension_numbers<[1], [0], [0], [1], [0, 0, 1, 1], [], []>} : vector<8x128xf32>, vector<128x128xf32>, vector<8x128xf32> -> vector<8x128xf32>
    %8 = math.log %7 : vector<8x128xf32>
    %9 = vector.broadcast %2 : vector<8x1xf32> to vector<8x128xf32>
    %10 = arith.addf %9, %8 : vector<8x128xf32>
    %c0_4 = arith.constant 0 : index
    %c0_5 = arith.constant 0 : index
    %11 = vector.load %arg3[%c0_4, %c0_5] : memref<8x128xf32, #tpu.memory_space<vmem>>, vector<8x128xf32>
    tpu.vector_store %arg3[%c0_4, %c0_5], %10 {strides = array<i32>} : memref<8x128xf32, #tpu.memory_space<vmem>>, vector<8x128xf32>,
    return
  }
  func.func @transform_0(%arg0: i32) -> (i32, i32) {
    %c0_i32 = arith.constant 0 : i32
    %c0_i32_0 = arith.constant 0 : i32
    %c0_i32_1 = arith.constant 0 : i32
    return %c0_i32, %c0_i32_0 : i32, i32
  }
  func.func @transform_1(%arg0: i32) -> (i32, i32) {
    %c0_i32 = arith.constant 0 : i32
    %c0_i32_0 = arith.constant 0 : i32
    return %arg0, %c0_i32 : i32, i32
  }
  func.func @transform_2(%arg0: i32) -> (i32, i32) {
    %c0_i32 = arith.constant 0 : i32
    %c0_i32_0 = arith.constant 0 : i32
    return %arg0, %c0_i32 : i32, i32
  }
}

</mosaic_0001>

<llo_original>
// kernel: transition_model_forward.3
$region0: #{transition_model_forward.3}
  #allocation0 [shape = 'u32[]', space=smem, size = 0x4, offset = 0x4, fixed_abs, tag = 'smem constant byte address 0x4 - core index']
  #allocation1 [shape = 'u32[144,128]{1,0:T(1,128)}', space=vmem, size = 0x12000, scoped, tag = 'internal scratch']
  %s0 = inlined_call_operand.vmem [shape: f32[128,128], index: 0, kind: input, shape index: {}]
  %s1 = inlined_call_operand.vmem [shape: f32[8,128], index: 1, kind: input, shape index: {}]
  %s2 = inlined_call_operand.vmem [shape: f32[8,128], index: 2, kind: output, shape index: {}]
  %s3 = sld [smem:[#allocation0]]
  $region18: #{transition_model_forward.3} parent=0
    _
  %s5 = ssub.s32 1, %s3
  %s6 = scalar_select 0, %s5, %s3
  // Predicated region
  $region2: #{transition_model_forward.3} parent=0 // pred_check
    _
  $region3: #{transition_model_forward.3} parent=0 // pred_check_branch
    %8 = sbr.rel (0) target = $region5
  $region4: #{transition_model_forward.3} parent=0 // pred_region
    _
  $region5: #{transition_model_forward.3} parent=0 // pred_fallthru
    _
  // Predicated region
  $region6: #{transition_model_forward.3} parent=0 // pred_check
    _
  $region7: #{transition_model_forward.3} parent=0 // pred_check_branch
    %10 = sbr.rel (0) target = $region9
  $region8: #{transition_model_forward.3} parent=0 // pred_region
    _
  $region9: #{transition_model_forward.3} parent=0 // pred_fallthru
    _
  %v11 = vld [vmem:[%s1] sm:$0xff]
  %12 = vmax.xlane.f32.xlu0 %v11
  %v13 = vpop.xlane.xlu0 %12
  %v14 = vsub.f32 %v11, %v13
  %v15 = vmul.f32 %v14, 1.442695
  %v16 = vpow.pop %v15
  %v17 = vld [vmem:[%s0] sm:$0xff]
  %v18 = vld [vmem:[%s0 + $0x8] sm:$0xff]
  %v19 = vld [vmem:[%s0 + $0x10] sm:$0xff]
  %v20 = vld [vmem:[%s0 + $0x18] sm:$0xff]
  %v21 = vld [vmem:[%s0 + $0x20] sm:$0xff]
  %v22 = vld [vmem:[%s0 + $0x28] sm:$0xff]
  %v23 = vld [vmem:[%s0 + $0x30] sm:$0xff]
  %v24 = vld [vmem:[%s0 + $0x38] sm:$0xff]
  %v25 = vld [vmem:[%s0 + $0x40] sm:$0xff]
  %v26 = vld [vmem:[%s0 + $0x48] sm:$0xff]
  %v27 = vld [vmem:[%s0 + $0x50] sm:$0xff]
  %v28 = vld [vmem:[%s0 + $0x58] sm:$0xff]
  %v29 = vld [vmem:[%s0 + $0x60] sm:$0xff]
  %v30 = vld [vmem:[%s0 + $0x68] sm:$0xff]
  %v31 = vld [vmem:[%s0 + $0x70] sm:$0xff]
  %v32 = vld [vmem:[%s0 + $0x78] sm:$0xff]
  %33 = vmatprep.subr.mxu0 0.0
  %34 = vmatpush1.msra.mxu0 %v32
  %35 = vmatprep.subr.mxu0 0.0
  %36 = vmatpush1.msra.mxu0 %v31
  %37 = vmatprep.subr.mxu0 0.0
  %38 = vmatpush1.msra.mxu0 %v30
  %39 = vmatprep.subr.mxu0 0.0
  %40 = vmatpush1.msra.mxu0 %v29
  %41 = vmatprep.subr.mxu0 0.0
  %42 = vmatpush1.msra.mxu0 %v28
  %43 = vmatprep.subr.mxu0 0.0
  %44 = vmatpush1.msra.mxu0 %v27
  %45 = vmatprep.subr.mxu0 0.0
  %46 = vmatpush1.msra.mxu0 %v26
  %47 = vmatprep.subr.mxu0 0.0
  %48 = vmatpush1.msra.mxu0 %v25
  %49 = vmatprep.subr.mxu0 0.0
  %50 = vmatpush1.msra.mxu0 %v24
  %51 = vmatprep.subr.mxu0 0.0
  %52 = vmatpush1.msra.mxu0 %v23
  %53 = vmatprep.subr.mxu0 0.0
  %54 = vmatpush1.msra.mxu0 %v22
  %55 = vmatprep.subr.mxu0 0.0
  %56 = vmatpush1.msra.mxu0 %v21
  %57 = vmatprep.subr.mxu0 0.0
  %58 = vmatpush1.msra.mxu0 %v20
  %59 = vmatprep.subr.mxu0 0.0
  %60 = vmatpush1.msra.mxu0 %v19
  %61 = vmatprep.subr.mxu0 0.0
  %62 = vmatpush1.msra.mxu0 %v18
  %63 = vmatprep.subr.mxu0 0.0
  %64 = vmatpush1.msra.mxu0 %v17
  %65 = vmatprep.subr.mxu0 0.0
  %66 = vmatpush2.msra.mxu0 0.0
  %67 = vmatprep.subr.mxu0 0.0
  %68 = vmatpush2.msra.mxu0 0.0
  %69 = vmatprep.subr.mxu0 0.0
  %70 = vmatpush2.msra.mxu0 0.0
  %71 = vmatprep.subr.mxu0 0.0
  %72 = vmatpush2.msra.mxu0 0.0
  %73 = vmatprep.subr.mxu0 0.0
  %74 = vmatpush2.msra.mxu0 0.0
  %75 = vmatprep.subr.mxu0 0.0
  %76 = vmatpush2.msra.mxu0 0.0
  %77 = vmatprep.subr.mxu0 0.0
  %78 = vmatpush2.msra.mxu0 0.0
  %79 = vmatprep.subr.mxu0 0.0
  %80 = vmatpush2.msra.mxu0 0.0
  %81 = vmatprep.subr.mxu0 0.0
  %82 = vmatpush2.msra.mxu0 0.0
  %83 = vmatprep.subr.mxu0 0.0
  %84 = vmatpush2.msra.mxu0 0.0
  %85 = vmatprep.subr.mxu0 0.0
  %86 = vmatpush2.msra.mxu0 0.0
  %87 = vmatprep.subr.mxu0 0.0
  %88 = vmatpush2.msra.mxu0 0.0
  %89 = vmatprep.subr.mxu0 0.0
  %90 = vmatpush2.msra.mxu0 0.0
  %91 = vmatprep.subr.mxu0 0.0
  %92 = vmatpush2.msra.mxu0 0.0
  %93 = vmatprep.subr.mxu0 0.0
  %94 = vmatpush2.msra.mxu0 0.0
  %95 = vmatprep.subr.mxu0 0.0
  %96 = vmatpush2.msra.mxu0 0.0
  %97 = vmatprep.mubr.f32.mxu0 0.0
  %98 = vmatmul.mubr.f32.gmra.mxu0 %v16
  %v99 = vpop.f32.mrf.mxu0
  %v100 = vadd.f32 0.0, %v99
  %v101 = vpop.f32.mrf.mxu0
  %102 = vdwg.mxu0
  %v103 = vlog2.pop %v100
  %v104 = vmul.f32 %v103, 0.6931472
  %v105 = vadd.f32 %v13, %v104
  %106 = vst [vmem:[%s2] sm:$0xff] %v105
  // Predicated region
  $region10: #{transition_model_forward.3} parent=0 // pred_check
    _
  $region11: #{transition_model_forward.3} parent=0 // pred_check_branch
    %108 = sbr.rel (0) target = $region13
  $region12: #{transition_model_forward.3} parent=0 // pred_region
    _
  $region13: #{transition_model_forward.3} parent=0 // pred_fallthru
    _
  // Predicated region
  $region14: #{transition_model_forward.3} parent=0 // pred_check
    _
  $region15: #{transition_model_forward.3} parent=0 // pred_check_branch
    %110 = sbr.rel (0) target = $region17
  $region16: #{transition_model_forward.3} parent=0 // pred_region
    _
  $region17: #{transition_model_forward.3} parent=0 // pred_fallthru
    _

// kernel: transition_model_forward.2
$region0: #{transition_model_forward.2}
  #allocation0 [shape = 'u32[]', space=smem, size = 0x4, offset = 0x4, fixed_abs, tag = 'smem constant byte address 0x4 - core index']
  #allocation1 [shape = 'u32[144,128]{1,0:T(1,128)}', space=vmem, size = 0x12000, scoped, tag = 'internal scratch']
  %s0 = inlined_call_operand.vmem [shape: f32[128,128], index: 0, kind: input, shape index: {}]
  %s1 = inlined_call_operand.vmem [shape: f32[128,128], index: 1, kind: output, shape index: {}]
  %s2 = sld [smem:[#allocation0]]
  $region14: #{transition_model_forward.2} parent=0
    _
  %s4 = ssub.s32 1, %s2
  %s5 = scalar_select 0, %s4, %s2
  // Predicated region
  $region2: #{transition_model_forward.2} parent=0 // pred_check
    _
  $region3: #{transition_model_forward.2} parent=0 // pred_check_branch
    %7 = sbr.rel (0) target = $region5
  $region4: #{transition_model_forward.2} parent=0 // pred_region
    _
  $region5: #{transition_model_forward.2} parent=0 // pred_fallthru
    _
  %v8 = vld [vmem:[%s0] sm:$0xff]
  %v9 = vld [vmem:[%s0 + $0x8] sm:$0xff]
  %v10 = vld [vmem:[%s0 + $0x10] sm:$0xff]
  %v11 = vld [vmem:[%s0 + $0x18] sm:$0xff]
  %v12 = vld [vmem:[%s0 + $0x20] sm:$0xff]
  %v13 = vld [vmem:[%s0 + $0x28] sm:$0xff]
  %v14 = vld [vmem:[%s0 + $0x30] sm:$0xff]
  %v15 = vld [vmem:[%s0 + $0x38] sm:$0xff]
  %v16 = vld [vmem:[%s0 + $0x40] sm:$0xff]
  %v17 = vld [vmem:[%s0 + $0x48] sm:$0xff]
  %v18 = vld [vmem:[%s0 + $0x50] sm:$0xff]
  %v19 = vld [vmem:[%s0 + $0x58] sm:$0xff]
  %v20 = vld [vmem:[%s0 + $0x60] sm:$0xff]
  %v21 = vld [vmem:[%s0 + $0x68] sm:$0xff]
  %v22 = vld [vmem:[%s0 + $0x70] sm:$0xff]
  %v23 = vld [vmem:[%s0 + $0x78] sm:$0xff]
  %24 = vmax.xlane.f32.xlu0 %v8
  %v25 = vpop.xlane.xlu0 %24
  %26 = vmax.xlane.f32.xlu0 %v9
  %v27 = vpop.xlane.xlu0 %26
  %28 = vmax.xlane.f32.xlu0 %v10
  %v29 = vpop.xlane.xlu0 %28
  %30 = vmax.xlane.f32.xlu0 %v11
  %v31 = vpop.xlane.xlu0 %30
  %32 = vmax.xlane.f32.xlu0 %v12
  %v33 = vpop.xlane.xlu0 %32
  %34 = vmax.xlane.f32.xlu0 %v13
  %v35 = vpop.xlane.xlu0 %34
  %36 = vmax.xlane.f32.xlu0 %v14
  %v37 = vpop.xlane.xlu0 %36
  %38 = vmax.xlane.f32.xlu0 %v15
  %v39 = vpop.xlane.xlu0 %38
  %40 = vmax.xlane.f32.xlu0 %v16
  %v41 = vpop.xlane.xlu0 %40
  %42 = vmax.xlane.f32.xlu0 %v17
  %v43 = vpop.xlane.xlu0 %42
  %44 = vmax.xlane.f32.xlu0 %v18
  %v45 = vpop.xlane.xlu0 %44
  %46 = vmax.xlane.f32.xlu0 %v19
  %v47 = vpop.xlane.xlu0 %46
  %48 = vmax.xlane.f32.xlu0 %v20
  %v49 = vpop.xlane.xlu0 %48
  %50 = vmax.xlane.f32.xlu0 %v21
  %v51 = vpop.xlane.xlu0 %50
  %52 = vmax.xlane.f32.xlu0 %v22
  %v53 = vpop.xlane.xlu0 %52
  %54 = vmax.xlane.f32.xlu0 %v23
  %v55 = vpop.xlane.xlu0 %54
  %v56 = vsub.f32 %v8, %v25
  %v57 = vsub.f32 %v9, %v27
  %v58 = vsub.f32 %v10, %v29
  %v59 = vsub.f32 %v11, %v31
  %v60 = vsub.f32 %v12, %v33
  %v61 = vsub.f32 %v13, %v35
  %v62 = vsub.f32 %v14, %v37
  %v63 = vsub.f32 %v15, %v39
  %v64 = vsub.f32 %v16, %v41
  %v65 = vsub.f32 %v17, %v43
  %v66 = vsub.f32 %v18, %v45
  %v67 = vsub.f32 %v19, %v47
  %v68 = vsub.f32 %v20, %v49
  %v69 = vsub.f32 %v21, %v51
  %v70 = vsub.f32 %v22, %v53
  %v71 = vsub.f32 %v23, %v55
  %v72 = vmul.f32 %v56, 1.442695
  %v73 = vpow.pop %v72
  %v74 = vmul.f32 %v57, 1.442695
  %v75 = vpow.pop %v74
  %v76 = vmul.f32 %v58, 1.442695
  %v77 = vpow.pop %v76
  %v78 = vmul.f32 %v59, 1.442695
  %v79 = vpow.pop %v78
  %v80 = vmul.f32 %v60, 1.442695
  %v81 = vpow.pop %v80
  %v82 = vmul.f32 %v61, 1.442695
  %v83 = vpow.pop %v82
  %v84 = vmul.f32 %v62, 1.442695
  %v85 = vpow.pop %v84
  %v86 = vmul.f32 %v63, 1.442695
  %v87 = vpow.pop %v86
  %v88 = vmul.f32 %v64, 1.442695
  %v89 = vpow.pop %v88
  %v90 = vmul.f32 %v65, 1.442695
  %v91 = vpow.pop %v90
  %v92 = vmul.f32 %v66, 1.442695
  %v93 = vpow.pop %v92
  %v94 = vmul.f32 %v67, 1.442695
  %v95 = vpow.pop %v94
  %v96 = vmul.f32 %v68, 1.442695
  %v97 = vpow.pop %v96
  %v98 = vmul.f32 %v69, 1.442695
  %v99 = vpow.pop %v98
  %v100 = vmul.f32 %v70, 1.442695
  %v101 = vpow.pop %v100
  %v102 = vmul.f32 %v71, 1.442695
  %v103 = vpow.pop %v102
  %104 = vadd.xlane.f32.xlu0 %v73
  %v105 = vpop.xlane.xlu0 %104
  %106 = vadd.xlane.f32.xlu0 %v75
  %v107 = vpop.xlane.xlu0 %106
  %108 = vadd.xlane.f32.xlu0 %v77
  %v109 = vpop.xlane.xlu0 %108
  %110 = vadd.xlane.f32.xlu0 %v79
  %v111 = vpop.xlane.xlu0 %110
  %112 = vadd.xlane.f32.xlu0 %v81
  %v113 = vpop.xlane.xlu0 %112
  %114 = vadd.xlane.f32.xlu0 %v83
  %v115 = vpop.xlane.xlu0 %114
  %116 = vadd.xlane.f32.xlu0 %v85
  %v117 = vpop.xlane.xlu0 %116
  %118 = vadd.xlane.f32.xlu0 %v87
  %v119 = vpop.xlane.xlu0 %118
  %120 = vadd.xlane.f32.xlu0 %v89
  %v121 = vpop.xlane.xlu0 %120
  %122 = vadd.xlane.f32.xlu0 %v91
  %v123 = vpop.xlane.xlu0 %122
  %124 = vadd.xlane.f32.xlu0 %v93
  %v125 = vpop.xlane.xlu0 %124
  %126 = vadd.xlane.f32.xlu0 %v95
  %v127 = vpop.xlane.xlu0 %126
  %128 = vadd.xlane.f32.xlu0 %v97
  %v129 = vpop.xlane.xlu0 %128
  %130 = vadd.xlane.f32.xlu0 %v99
  %v131 = vpop.xlane.xlu0 %130
  %132 = vadd.xlane.f32.xlu0 %v101
  %v133 = vpop.xlane.xlu0 %132
  %134 = vadd.xlane.f32.xlu0 %v103
  %v135 = vpop.xlane.xlu0 %134
  %v136 = vrcp.pop %v105
  %v137 = vmul.f32 %v73, %v136
  %v138 = vrcp.pop %v107
  %v139 = vmul.f32 %v75, %v138
  %v140 = vrcp.pop %v109
  %v141 = vmul.f32 %v77, %v140
  %v142 = vrcp.pop %v111
  %v143 = vmul.f32 %v79, %v142
  %v144 = vrcp.pop %v113
  %v145 = vmul.f32 %v81, %v144
  %v146 = vrcp.pop %v115
  %v147 = vmul.f32 %v83, %v146
  %v148 = vrcp.pop %v117
  %v149 = vmul.f32 %v85, %v148
  %v150 = vrcp.pop %v119
  %v151 = vmul.f32 %v87, %v150
  %v152 = vrcp.pop %v121
  %v153 = vmul.f32 %v89, %v152
  %v154 = vrcp.pop %v123
  %v155 = vmul.f32 %v91, %v154
  %v156 = vrcp.pop %v125
  %v157 = vmul.f32 %v93, %v156
  %v158 = vrcp.pop %v127
  %v159 = vmul.f32 %v95, %v158
  %v160 = vrcp.pop %v129
  %v161 = vmul.f32 %v97, %v160
  %v162 = vrcp.pop %v131
  %v163 = vmul.f32 %v99, %v162
  %v164 = vrcp.pop %v133
  %v165 = vmul.f32 %v101, %v164
  %v166 = vrcp.pop %v135
  %v167 = vmul.f32 %v103, %v166
  %168 = vst [vmem:[%s1] sm:$0xff] %v137
  %169 = vst [vmem:[%s1 + $0x8] sm:$0xff] %v139
  %170 = vst [vmem:[%s1 + $0x10] sm:$0xff] %v141
  %171 = vst [vmem:[%s1 + $0x18] sm:$0xff] %v143
  %172 = vst [vmem:[%s1 + $0x20] sm:$0xff] %v145
  %173 = vst [vmem:[%s1 + $0x28] sm:$0xff] %v147
  %174 = vst [vmem:[%s1 + $0x30] sm:$0xff] %v149
  %175 = vst [vmem:[%s1 + $0x38] sm:$0xff] %v151
  %176 = vst [vmem:[%s1 + $0x40] sm:$0xff] %v153
  %177 = vst [vmem:[%s1 + $0x48] sm:$0xff] %v155
  %178 = vst [vmem:[%s1 + $0x50] sm:$0xff] %v157
  %179 = vst [vmem:[%s1 + $0x58] sm:$0xff] %v159
  %180 = vst [vmem:[%s1 + $0x60] sm:$0xff] %v161
  %181 = vst [vmem:[%s1 + $0x68] sm:$0xff] %v163
  %182 = vst [vmem:[%s1 + $0x70] sm:$0xff] %v165
  %183 = vst [vmem:[%s1 + $0x78] sm:$0xff] %v167
  // Predicated region
  $region6: #{transition_model_forward.2} parent=0 // pred_check
    _
  $region7: #{transition_model_forward.2} parent=0 // pred_check_branch
    %185 = sbr.rel (0) target = $region9
  $region8: #{transition_model_forward.2} parent=0 // pred_region
    _
  $region9: #{transition_model_forward.2} parent=0 // pred_fallthru
    _
  // Predicated region
  $region10: #{transition_model_forward.2} parent=0 // pred_check
    _
  $region11: #{transition_model_forward.2} parent=0 // pred_check_branch
    %187 = sbr.rel (0) target = $region13
  $region12: #{transition_model_forward.2} parent=0 // pred_region
    _
  $region13: #{transition_model_forward.2} parent=0 // pred_fallthru
    _

</llo_original>
